<compile_context>
chip_gen: v5e
topology: v5e:2x2
jax: 0.10.0
libtpu: 0.0.40
codegen_flags: <defaults>
</compile_context>

<pallas_src>
import jax
import jax.numpy as jnp
from jax.experimental import pallas as pl
from jax.experimental.pallas import tpu as pltpu

HIDDEN = 256


def _critic_kernel(state_ref, action_ref, w1s_ref, w1a_ref, b1_ref,
                   w2_ref, b2_ref, w3_ref, b3_ref, out_ref):
    # l1: split matmul replaces cat([state, action]) @ W1.  bf16 MXU operands,
    # f32 accumulation; bias-add / ReLU in f32.
    h1 = (jnp.dot(state_ref[...].astype(jnp.bfloat16), w1s_ref[...],
                  preferred_element_type=jnp.float32)
          + jnp.dot(action_ref[...].astype(jnp.bfloat16), w1a_ref[...],
                    preferred_element_type=jnp.float32)
          + b1_ref[...])
    h1 = jnp.maximum(h1, 0.0)

    # l2: (TB, 256) @ (256, 256) — bf16 operands, f32 accumulate, f32 ReLU.
    h2 = jnp.dot(h1.astype(jnp.bfloat16), w2_ref[...],
                 preferred_element_type=jnp.float32) + b2_ref[...]
    h2 = jnp.maximum(h2, 0.0)

    # l3: 256 -> 1 on the MXU (slack after l2); bias read as an SMEM scalar.
    q = jnp.dot(h2.astype(jnp.bfloat16), w3_ref[...],
                preferred_element_type=jnp.float32) + b3_ref[0, 0]
    out_ref[...] = q.astype(out_ref.dtype)


def _round_up(x, m):
    return (x + m - 1) // m * m


def critic1_forward(state, action, params, *, max_tile=512):
    """Pallas equivalent of Critic1.forward(state, action)."""
    w1_s, w1_a, b1, w2, b2, w3, b3 = params
    B, state_dim = state.shape
    action_dim = action.shape[1]

    # Batch tile: multiple of 8, capped at max_tile.  No padding of the batch:
    # Pallas pads reads / masks writes on the ragged final block.
    TB = min(max_tile, _round_up(B, 8))
    # v7x has 2 TensorCores: make sure the "parallel" batch axis has >= 2 tiles
    # whenever there is enough work to split.
    if B > 16 and pl.cdiv(B, TB) < 2:
        TB = _round_up(pl.cdiv(B, 2), 8)
    num_tiles = pl.cdiv(B, TB)

    D = state_dim + action_dim
    flops = 2 * B * (D * HIDDEN + HIDDEN * HIDDEN + HIDDEN)
    bytes_accessed = (
        4 * B * (D + 1)                                 # f32 activations in/out
        + 2 * (D * HIDDEN + HIDDEN * HIDDEN + HIDDEN)   # bf16 weights
        + 4 * (2 * HIDDEN + 1)                          # f32 biases
    )

    resident = lambda shape: pl.BlockSpec(shape, lambda i: (0,) * len(shape))

    out = pl.pallas_call(
        _critic_kernel,
        out_shape=jax.ShapeDtypeStruct((B, 1), jnp.float32),
        grid=(num_tiles,),
        in_specs=[
            pl.BlockSpec((TB, state_dim), lambda i: (i, 0)),    # state tile
            pl.BlockSpec((TB, action_dim), lambda i: (i, 0)),   # action tile
            resident(w1_s.shape),
            resident(w1_a.shape),
            resident(b1.shape),
            resident(w2.shape),
            resident(b2.shape),
            resident(w3.shape),
            pl.BlockSpec(memory_space=pltpu.SMEM),              # b3 scalar
        ],
        out_specs=pl.BlockSpec((TB, 1), lambda i: (i, 0)),
        compiler_params=pltpu.CompilerParams(
            dimension_semantics=("parallel",)),
        cost_estimate=pl.CostEstimate(
            flops=flops, transcendentals=0, bytes_accessed=bytes_accessed),
    )(state, action, w1_s, w1_a, b1, w2, b2, w3, b3)

    return out


def init_params(key, state_dim, action_dim, hidden=HIDDEN):
    """PyTorch-Linear-style init; weights stored pre-split / pre-shaped and
    cast to bf16 for the MXU; biases stay f32."""
    in_dim = state_dim + action_dim
    k1, k2, k3, k4, k5, k6 = jax.random.split(key, 6)

    def lin(kw, kb, fan_in, fan_out):
        bound = 1.0 / jnp.sqrt(fan_in)
        w = jax.random.uniform(kw, (fan_in, fan_out), jnp.float32,
                               minval=-bound, maxval=bound)
        b = jax.random.uniform(kb, (1, fan_out), jnp.float32,
                               minval=-bound, maxval=bound)
        return w, b

    w1, b1 = lin(k1, k2, in_dim, hidden)
    w1 = w1.astype(jnp.bfloat16)
    w1_s, w1_a = w1[:state_dim], w1[state_dim:]   # split -> no runtime concat
    w2, b2 = lin(k3, k4, hidden, hidden)
    w2 = w2.astype(jnp.bfloat16)
    w3, b3 = lin(k5, k6, hidden, 1)
    w3 = w3.astype(jnp.bfloat16)                  # (256, 1) column for MXU l3
    b3 = b3.reshape(1, 1)                         # SMEM scalar, f32
    return (w1_s, w1_a, b1, w2, b2, w3, b3)


def critic1_ref(state, action, params):
    """Pure-JAX reference matching torch.cat + 3 Linear layers, using the same
    bf16 matmul operands / f32 accumulation as the kernel."""
    w1_s, w1_a, b1, w2, b2, w3, b3 = params
    w1 = jnp.concatenate([w1_s, w1_a], axis=0)
    sa = jnp.concatenate([state, action], axis=1).astype(jnp.bfloat16)
    h1 = jnp.maximum(
        jnp.dot(sa, w1, preferred_element_type=jnp.float32) + b1, 0.0)
    h2 = jnp.maximum(
        jnp.dot(h1.astype(jnp.bfloat16), w2,
                preferred_element_type=jnp.float32) + b2, 0.0)
    return jnp.dot(h2.astype(jnp.bfloat16), w3,
                   preferred_element_type=jnp.float32) + b3


if __name__ == "__main__":
    key = jax.random.PRNGKey(0)
    k_params, k_state, k_action = jax.random.split(key, 3)

    state_dim, action_dim = 16, 8
    params = init_params(k_params, state_dim, action_dim)

    # Test 1: small, evenly tiled batch.
    batch = 8
    state = jax.random.normal(k_state, (batch, state_dim), jnp.float32)
    action = jax.random.normal(k_action, (batch, action_dim), jnp.float32)
    q = jax.block_until_ready(critic1_forward(state, action, params))
    q_ref = critic1_ref(state, action, params)
    assert q.shape == (batch, 1)
    assert jnp.allclose(q, q_ref, atol=1e-2, rtol=1e-2)

    # Test 2: ragged batch -> exercises the partial final block
    # (padded reads, masked writes) and the >=2-tile grid path.
    batch2 = 20
    state2 = jax.random.normal(jax.random.PRNGKey(1), (batch2, state_dim),
                               jnp.float32)
    action2 = jax.random.normal(jax.random.PRNGKey(2), (batch2, action_dim),
                                jnp.float32)
    q2 = jax.block_until_ready(critic1_forward(state2, action2, params))
    q2_ref = critic1_ref(state2, action2, params)
    assert q2.shape == (batch2, 1)
    assert jnp.allclose(q2, q2_ref, atol=1e-2, rtol=1e-2)

    print("KERNEL_OK")
</pallas_src>

<mosaic_0001>
module attributes {stable_mosaic.version = 11 : i64} {
  func.func @_critic_kernel(%arg0: i32, %arg1: memref<8x16xf32, #tpu.memory_space<vmem>>, %arg2: memref<8x8xf32, #tpu.memory_space<vmem>>, %arg3: memref<16x256xbf16, #tpu.memory_space<vmem>>, %arg4: memref<8x256xbf16, #tpu.memory_space<vmem>>, %arg5: memref<1x256xf32, #tpu.memory_space<vmem>>, %arg6: memref<256x256xbf16, #tpu.memory_space<vmem>>, %arg7: memref<1x256xf32, #tpu.memory_space<vmem>>, %arg8: memref<256x1xbf16, #tpu.memory_space<vmem>>, %arg9: memref<1x1xf32, #tpu.memory_space<smem>>, %arg10: memref<8x1xf32, #tpu.memory_space<vmem>>) attributes {dimension_semantics = [#tpu.dimension_semantics<parallel>], iteration_bounds = array<i64: 1>, scalar_prefetch = 0 : i64, scratch_operands = 0 : i64, tpu.core_type = #tpu.core_type<tc>, window_params = [{transform_indices = @transform_0, window_bounds = array<i64: 8, 16>}, {transform_indices = @transform_1, window_bounds = array<i64: 8, 8>}, {pipeline_mode = #tpu.pipeline_mode<synchronous>, transform_indices = @transform_2, window_bounds = array<i64: 16, 256>}, {pipeline_mode = #tpu.pipeline_mode<synchronous>, transform_indices = @transform_3, window_bounds = array<i64: 8, 256>}, {pipeline_mode = #tpu.pipeline_mode<synchronous>, transform_indices = @transform_4, window_bounds = array<i64: 1, 256>}, {pipeline_mode = #tpu.pipeline_mode<synchronous>, transform_indices = @transform_5, window_bounds = array<i64: 256, 256>}, {pipeline_mode = #tpu.pipeline_mode<synchronous>, transform_indices = @transform_6, window_bounds = array<i64: 1, 256>}, {pipeline_mode = #tpu.pipeline_mode<synchronous>, transform_indices = @transform_7, window_bounds = array<i64: 256, 1>}, {transform_indices = @transform_8, window_bounds = array<i64: 1, 1>}, {transform_indices = @transform_9, window_bounds = array<i64: 8, 1>}]} {
    %c0 = arith.constant 0 : index
    %c0_0 = arith.constant 0 : index
    %0 = vector.load %arg1[%c0, %c0_0] : memref<8x16xf32, #tpu.memory_space<vmem>>, vector<8x16xf32>
    %1 = arith.truncf %0 : vector<8x16xf32> to vector<8x16xbf16>
    %c0_1 = arith.constant 0 : index
    %c0_2 = arith.constant 0 : index
    %2 = vector.load %arg3[%c0_1, %c0_2] : memref<16x256xbf16, #tpu.memory_space<vmem>>, vector<16x256xbf16>
    %cst = arith.constant dense<0.000000e+00> : vector<8x256xf32>
    %3 = tpu.matmul %1, %2, %cst {dimension_numbers = #tpu.dot_dimension_numbers<[1], [0], [0], [1], [0, 0, 1, 1], [], []>} : vector<8x16xbf16>, vector<16x256xbf16>, vector<8x256xf32> -> vector<8x256xf32>
    %c0_3 = arith.constant 0 : index
    %c0_4 = arith.constant 0 : index
    %4 = vector.load %arg2[%c0_3, %c0_4] : memref<8x8xf32, #tpu.memory_space<vmem>>, vector<8x8xf32>
    %5 = arith.truncf %4 : vector<8x8xf32> to vector<8x8xbf16>
    %c0_5 = arith.constant 0 : index
    %c0_6 = arith.constant 0 : index
    %6 = vector.load %arg4[%c0_5, %c0_6] : memref<8x256xbf16, #tpu.memory_space<vmem>>, vector<8x256xbf16>
    %cst_7 = arith.constant dense<0.000000e+00> : vector<8x256xf32>
    %7 = tpu.matmul %5, %6, %cst_7 {dimension_numbers = #tpu.dot_dimension_numbers<[1], [0], [0], [1], [0, 0, 1, 1], [], []>} : vector<8x8xbf16>, vector<8x256xbf16>, vector<8x256xf32> -> vector<8x256xf32>
    %8 = arith.addf %3, %7 : vector<8x256xf32>
    %c0_8 = arith.constant 0 : index
    %c0_9 = arith.constant 0 : index
    %9 = vector.load %arg5[%c0_8, %c0_9] : memref<1x256xf32, #tpu.memory_space<vmem>>, vector<1x256xf32>
    %10 = vector.broadcast %9 : vector<1x256xf32> to vector<8x256xf32>
    %11 = arith.addf %8, %10 : vector<8x256xf32>
    %cst_10 = arith.constant 0.000000e+00 : f32
    %12 = vector.broadcast %cst_10 : f32 to vector<8x256xf32>
    %13 = arith.maximumf %11, %12 : vector<8x256xf32>
    %14 = arith.truncf %13 : vector<8x256xf32> to vector<8x256xbf16>
    %c0_11 = arith.constant 0 : index
    %c0_12 = arith.constant 0 : index
    %15 = vector.load %arg6[%c0_11, %c0_12] : memref<256x256xbf16, #tpu.memory_space<vmem>>, vector<256x256xbf16>
    %cst_13 = arith.constant dense<0.000000e+00> : vector<8x256xf32>
    %16 = tpu.matmul %14, %15, %cst_13 {dimension_numbers = #tpu.dot_dimension_numbers<[1], [0], [0], [1], [0, 0, 1, 1], [], []>} : vector<8x256xbf16>, vector<256x256xbf16>, vector<8x256xf32> -> vector<8x256xf32>
    %c0_14 = arith.constant 0 : index
    %c0_15 = arith.constant 0 : index
    %17 = vector.load %arg7[%c0_14, %c0_15] : memref<1x256xf32, #tpu.memory_space<vmem>>, vector<1x256xf32>
    %18 = vector.broadcast %17 : vector<1x256xf32> to vector<8x256xf32>
    %19 = arith.addf %16, %18 : vector<8x256xf32>
    %cst_16 = arith.constant 0.000000e+00 : f32
    %20 = vector.broadcast %cst_16 : f32 to vector<8x256xf32>
    %21 = arith.maximumf %19, %20 : vector<8x256xf32>
    %22 = arith.truncf %21 : vector<8x256xf32> to vector<8x256xbf16>
    %c0_17 = arith.constant 0 : index
    %c0_18 = arith.constant 0 : index
    %23 = vector.load %arg8[%c0_17, %c0_18] : memref<256x1xbf16, #tpu.memory_space<vmem>>, vector<256x1xbf16>
    %cst_19 = arith.constant dense<0.000000e+00> : vector<8x1xf32>
    %24 = tpu.matmul %22, %23, %cst_19 {dimension_numbers = #tpu.dot_dimension_numbers<[1], [0], [0], [1], [0, 0, 1, 1], [], []>} : vector<8x256xbf16>, vector<256x1xbf16>, vector<8x1xf32> -> vector<8x1xf32>
    %c0_20 = arith.constant 0 : index
    %c0_21 = arith.constant 0 : index
    %25 = memref.load %arg9[%c0_20, %c0_21] : memref<1x1xf32, #tpu.memory_space<smem>>
    %26 = vector.broadcast %25 : f32 to vector<8x1xf32>
    %27 = arith.addf %24, %26 : vector<8x1xf32>
    %c0_22 = arith.constant 0 : index
    %c0_23 = arith.constant 0 : index
    %28 = vector.load %arg10[%c0_22, %c0_23] : memref<8x1xf32, #tpu.memory_space<vmem>>, vector<8x1xf32>
    tpu.vector_store %arg10[%c0_22, %c0_23], %27 {strides = array<i32>} : memref<8x1xf32, #tpu.memory_space<vmem>>, vector<8x1xf32>,
    return
  }
  func.func @transform_0(%arg0: i32) -> (i32, i32) {
    %c0_i32 = arith.constant 0 : i32
    %c0_i32_0 = arith.constant 0 : i32
    return %arg0, %c0_i32 : i32, i32
  }
  func.func @transform_1(%arg0: i32) -> (i32, i32) {
    %c0_i32 = arith.constant 0 : i32
    %c0_i32_0 = arith.constant 0 : i32
    return %arg0, %c0_i32 : i32, i32
  }
  func.func @transform_2(%arg0: i32) -> (i32, i32) {
    %c0_i32 = arith.constant 0 : i32
    %c0_i32_0 = arith.constant 0 : i32
    %c0_i32_1 = arith.constant 0 : i32
    return %c0_i32, %c0_i32_0 : i32, i32
  }
  func.func @transform_3(%arg0: i32) -> (i32, i32) {
    %c0_i32 = arith.constant 0 : i32
    %c0_i32_0 = arith.constant 0 : i32
    %c0_i32_1 = arith.constant 0 : i32
    return %c0_i32, %c0_i32_0 : i32, i32
  }
  func.func @transform_4(%arg0: i32) -> (i32, i32) {
    %c0_i32 = arith.constant 0 : i32
    %c0_i32_0 = arith.constant 0 : i32
    %c0_i32_1 = arith.constant 0 : i32
    return %c0_i32, %c0_i32_0 : i32, i32
  }
  func.func @transform_5(%arg0: i32) -> (i32, i32) {
    %c0_i32 = arith.constant 0 : i32
    %c0_i32_0 = arith.constant 0 : i32
    %c0_i32_1 = arith.constant 0 : i32
    return %c0_i32, %c0_i32_0 : i32, i32
  }
  func.func @transform_6(%arg0: i32) -> (i32, i32) {
    %c0_i32 = arith.constant 0 : i32
    %c0_i32_0 = arith.constant 0 : i32
    %c0_i32_1 = arith.constant 0 : i32
    return %c0_i32, %c0_i32_0 : i32, i32
  }
  func.func @transform_7(%arg0: i32) -> (i32, i32) {
    %c0_i32 = arith.constant 0 : i32
    %c0_i32_0 = arith.constant 0 : i32
    %c0_i32_1 = arith.constant 0 : i32
    return %c0_i32, %c0_i32_0 : i32, i32
  }
  func.func @transform_8(%arg0: i32) -> (i32, i32) {
    %c0_i32 = arith.constant 0 : i32
    %c0_i32_0 = arith.constant 0 : i32
    %c0_i32_1 = arith.constant 0 : i32
    return %c0_i32, %c0_i32_0 : i32, i32
  }
  func.func @transform_9(%arg0: i32) -> (i32, i32) {
    %c0_i32 = arith.constant 0 : i32
    %c0_i32_0 = arith.constant 0 : i32
    return %arg0, %c0_i32 : i32, i32
  }
}

</mosaic_0001>

<llo_original>
// kernel: tpu_custom_call.1
$region0: #{tpu_custom_call.1}
  #allocation0 [shape = 'u32[]', space=smem, size = 0x4, offset = 0x4, fixed_abs, tag = 'smem constant byte address 0x4 - core index']
  #allocation1 [shape = 'u32[72,128]{1,0:T(1,128)}', space=vmem, size = 0x9000, scoped, tag = 'internal scratch']
  #allocation2 [shape = 'f32[1,1]{1,0:T(1,128)S(6)}', space=smem, size = 0x200, scoped, tag = 'scoped memory for tpu_custom_call.1']
  %s0 = inlined_call_operand.vmem [shape: f32[8,16], index: 0, kind: input, shape index: {}]
  %s1 = inlined_call_operand.vmem [shape: f32[8,8], index: 1, kind: input, shape index: {}]
  %s2 = inlined_call_operand.vmem [shape: bf16[16,256], index: 2, kind: input, shape index: {}]
  %s3 = inlined_call_operand.vmem [shape: bf16[8,256], index: 3, kind: input, shape index: {}]
  %s4 = inlined_call_operand.vmem [shape: f32[1,256], index: 4, kind: input, shape index: {}]
  %s5 = inlined_call_operand.hbm [shape: bf16[256,256], index: 5, kind: input, shape index: {}]
  %s6 = inlined_call_operand.vmem [shape: f32[1,256], index: 6, kind: input, shape index: {}]
  %s7 = inlined_call_operand.vmem [shape: bf16[256,1], index: 7, kind: input, shape index: {}]
  %s8 = inlined_call_operand.<no memory space> [shape: f32[1,1], index: 8, kind: input, shape index: {}]
  %s9 = inlined_call_operand.vmem [shape: f32[8,1], index: 9, kind: output, shape index: {}]
  %s10 = sld [smem:[#allocation0]]
  $region50: #{tpu_custom_call.1} parent=0
    _
  %s12 = ssub.s32 1, %s10
  %s13 = scalar_select 0, %s12, %s10
  %14 = sst [smem:[#allocation2]] %s8
  $region1: #{tpu_custom_call.1} parent=0
    #allocation3 [shape = 'u8[131072]{0}', space=vmem, size = 0x20000, scoped, tag = 'input window, operand 5, single buffered']
    #allocation4 [shape = 's32[1]{0}', space=sflag, size = 0x4, scoped, tag = 'scoped memory for tpu_custom_call.1']
    %15 = vsyncpa [#allocation4], 0
    // Predicated region
    $region2: #{tpu_custom_call.1} parent=1 // pred_check
      _
    $region3: #{tpu_custom_call.1} parent=1 // pred_check_branch
      %17 = sbr.rel (0) target = $region5
    $region4: #{tpu_custom_call.1} parent=1 // pred_region
      _
    $region5: #{tpu_custom_call.1} parent=1 // pred_fallthru
      _
    // Predicated region
    $region6: #{tpu_custom_call.1} parent=1 // pred_check
      _
    $region7: #{tpu_custom_call.1} parent=1 // pred_check_branch
      %19 = sbr.rel (0) target = $region9
    $region8: #{tpu_custom_call.1} parent=1 // pred_region
      _
    $region9: #{tpu_custom_call.1} parent=1 // pred_fallthru
      _
    // Predicated region
    $region10: #{tpu_custom_call.1} parent=1 // pred_check
      _
    $region11: #{tpu_custom_call.1} parent=1 // pred_check_branch
      %21 = sbr.rel (0) target = $region13
    $region12: #{tpu_custom_call.1} parent=1 // pred_region
      _
    $region13: #{tpu_custom_call.1} parent=1 // pred_fallthru
      _
    // Predicated region
    $region14: #{tpu_custom_call.1} parent=1 // pred_check
      _
    $region15: #{tpu_custom_call.1} parent=1 // pred_check_branch
      %23 = sbr.rel (0) target = $region17
    $region16: #{tpu_custom_call.1} parent=1 // pred_region
      _
    $region17: #{tpu_custom_call.1} parent=1 // pred_fallthru
      _
    // Predicated region
    $region18: #{tpu_custom_call.1} parent=1 // pred_check
      _
    $region19: #{tpu_custom_call.1} parent=1 // pred_check_branch
      %25 = sbr.rel (0) target = $region21
    $region20: #{tpu_custom_call.1} parent=1 // pred_region
      _
    $region21: #{tpu_custom_call.1} parent=1 // pred_fallthru
      _
    // Predicated region
    $region22: #{tpu_custom_call.1} parent=1 // pred_check
      _
    $region23: #{tpu_custom_call.1} parent=1 // pred_check_branch
      %27 = sbr.rel (0) target = $region25
    $region24: #{tpu_custom_call.1} parent=1 // pred_region
      %29 = vsyncadd [#allocation4], 0
      %s30 = sshll.u32 %s5, 4
      %s31 = int_to_ptr.hbm [resolvable:$true] %s30
      %s32 = sshll.u32 [#allocation3], 4
      %s33 = int_to_ptr.vmem [resolvable:$true] %s32
      %38 = dma.hbm_to_vmem [thread:$0]  %s31, 4096, %s33, [#allocation4], 128, 128, 8
    $region25: #{tpu_custom_call.1} parent=1 // pred_fallthru
      _
    // Predicated region
    $region26: #{tpu_custom_call.1} parent=1 // pred_check
      _
    $region27: #{tpu_custom_call.1} parent=1 // pred_check_branch
      %40 = sbr.rel (0) target = $region29
    $region28: #{tpu_custom_call.1} parent=1 // pred_region
      _
    $region29: #{tpu_custom_call.1} parent=1 // pred_fallthru
      _
    // Predicated region
    $region30: #{tpu_custom_call.1} parent=1 // pred_check
      _
    $region31: #{tpu_custom_call.1} parent=1 // pred_check_branch
      %42 = sbr.rel (0) target = $region33
    $region32: #{tpu_custom_call.1} parent=1 // pred_region
      _
    $region33: #{tpu_custom_call.1} parent=1 // pred_fallthru
      _
    // Predicated region
    $region34: #{tpu_custom_call.1} parent=1 // pred_check
      _
    $region35: #{tpu_custom_call.1} parent=1 // pred_check_branch
      %44 = sbr.rel (0) target = $region37
    $region36: #{tpu_custom_call.1} parent=1 // pred_region
      _
    $region37: #{tpu_custom_call.1} parent=1 // pred_fallthru
      _
    // Predicated region
    $region38: #{tpu_custom_call.1} parent=1 // pred_check
      _
    $region39: #{tpu_custom_call.1} parent=1 // pred_check_branch
      %46 = sbr.rel (0) target = $region41
    $region40: #{tpu_custom_call.1} parent=1 // pred_region
      %48 = dma.done [#allocation4], 4096
    $region41: #{tpu_custom_call.1} parent=1 // pred_fallthru
      _
    %v50 = vld [vmem:[%s0] sm:$0xff]
    %v51 = vpack.c.bf16 %v50, %v50
    %v52 = vld [vmem:[%s2] sm:$0xff]
    %v53 = vld [vmem:[%s2 + $0x8] sm:$0xff]
    %v54 = vld [vmem:[%s1] sm:$0xff]
    %v55 = vpack.c.bf16 %v54, %v54
    %v56 = vld [vmem:[%s3] sm:$0xff]
    %v58 = vunpack.c.l.b16 %v56
    %v59 = vunpack.c.h.b16 %v56
    %v60 = vpack.c.b16 %v58, %v58
    %v61 = vpack.c.b16 %v59, %v59
    %vm62 = vcmask 64512
    %v64 = vsel %vm62, %v55, 0
    %vm66 = vcmask 1043456
    %v68 = vsel %vm66, %v60, 0
    %v71 = vsel %vm66, %v61, 0
    %73 = vmatpush.bf16.msra.mxu0 0
    %74 = vmatpush.bf16.msra.mxu0 0
    %75 = vmatpush.bf16.msra.mxu0 0
    %76 = vmatpush.bf16.msra.mxu0 0
    %77 = vmatpush.bf16.msra.mxu0 0
    %78 = vmatpush.bf16.msra.mxu0 0
    %79 = vmatpush.bf16.msra.mxu0 0
    %80 = vmatpush.bf16.msra.mxu0 %v68
    %81 = vmatmul.bf16.gmra.mxu0 %v64
    %v82 = vpop.f32.mrf.mxu0
    %v83 = vadd.f32 0.0, %v82
    %v84 = vpop.f32.mrf.mxu0
    %85 = vdwg.mxu0
    %86 = vmatpush.bf16.msra.mxu0 0
    %87 = vmatpush.bf16.msra.mxu0 0
    %88 = vmatpush.bf16.msra.mxu0 0
    %89 = vmatpush.bf16.msra.mxu0 0
    %90 = vmatpush.bf16.msra.mxu0 0
    %91 = vmatpush.bf16.msra.mxu0 0
    %92 = vmatpush.bf16.msra.mxu0 0
    %93 = vmatpush.bf16.msra.mxu0 %v71
    %94 = vmatmul.bf16.gmra.mxu0 %v64
    %v95 = vpop.f32.mrf.mxu0
    %v96 = vadd.f32 0.0, %v95
    %v97 = vpop.f32.mrf.mxu0
    %98 = vdwg.mxu0
    %v101 = vunpack.c.l.b16 %v52
    %v102 = vunpack.c.h.b16 %v52
    %v103 = vunpack.c.l.b16 %v53
    %v104 = vunpack.c.h.b16 %v53
    %v105 = vpack.c.b16 %v103, %v101
    %v106 = vpack.c.b16 %v104, %v102
    %vm109 = vcmask 130048
    %v111 = vsel %vm109, %v51, 0
    %113 = vmatpush.bf16.msra.mxu0 0
    %114 = vmatpush.bf16.msra.mxu0 0
    %115 = vmatpush.bf16.msra.mxu0 0
    %116 = vmatpush.bf16.msra.mxu0 0
    %117 = vmatpush.bf16.msra.mxu0 0
    %118 = vmatpush.bf16.msra.mxu0 0
    %119 = vmatpush.bf16.msra.mxu0 0
    %120 = vmatpush.bf16.msra.mxu0 %v105
    %121 = vmatmul.bf16.gmra.mxu0 %v111
    %v122 = vpop.f32.mrf.mxu0
    %v123 = vadd.f32 %v83, %v122
    %v124 = vpop.f32.mrf.mxu0
    %125 = vdwg.mxu0
    %126 = vmatpush.bf16.msra.mxu0 0
    %127 = vmatpush.bf16.msra.mxu0 0
    %128 = vmatpush.bf16.msra.mxu0 0
    %129 = vmatpush.bf16.msra.mxu0 0
    %130 = vmatpush.bf16.msra.mxu0 0
    %131 = vmatpush.bf16.msra.mxu0 0
    %132 = vmatpush.bf16.msra.mxu0 0
    %133 = vmatpush.bf16.msra.mxu0 %v106
    %134 = vmatmul.bf16.gmra.mxu0 %v111
    %v135 = vpop.f32.mrf.mxu0
    %v136 = vadd.f32 %v96, %v135
    %v137 = vpop.f32.mrf.mxu0
    %138 = vdwg.mxu0
    %v139 = vld [vmem:[%s4] sm:$0x3]
    %v141 = vperm.slane %v139, 0
    %v142 = vperm.slane %v139, 1
    %v145 = vadd.f32 %v123, %v141
    %v146 = vadd.f32 %v136, %v142
    %v147 = vmax.f32 %v145, 0.0
    %v148 = vmax.f32 %v146, 0.0
    %v149 = vpack.c.bf16 %v147, %v147
    %v150 = vpack.c.bf16 %v148, %v148
    %v151 = vld [vmem:[#allocation3] sm:$0xff]
    %v152 = vld [vmem:[#allocation3 + $0x8] sm:$0xff]
    %v153 = vld [vmem:[#allocation3 + $0x10] sm:$0xff]
    %v154 = vld [vmem:[#allocation3 + $0x18] sm:$0xff]
    %v155 = vld [vmem:[#allocation3 + $0x20] sm:$0xff]
    %v156 = vld [vmem:[#allocation3 + $0x28] sm:$0xff]
    %v157 = vld [vmem:[#allocation3 + $0x30] sm:$0xff]
    %v158 = vld [vmem:[#allocation3 + $0x38] sm:$0xff]
    %v159 = vld [vmem:[#allocation3 + $0x40] sm:$0xff]
    %v160 = vld [vmem:[#allocation3 + $0x48] sm:$0xff]
    %v161 = vld [vmem:[#allocation3 + $0x50] sm:$0xff]
    %v162 = vld [vmem:[#allocation3 + $0x58] sm:$0xff]
    %v163 = vld [vmem:[#allocation3 + $0x60] sm:$0xff]
    %v164 = vld [vmem:[#allocation3 + $0x68] sm:$0xff]
    %v165 = vld [vmem:[#allocation3 + $0x70] sm:$0xff]
    %v166 = vld [vmem:[#allocation3 + $0x78] sm:$0xff]
    %v167 = vld [vmem:[#allocation3 + $0x80] sm:$0xff]
    %v168 = vld [vmem:[#allocation3 + $0x88] sm:$0xff]
    %v169 = vld [vmem:[#allocation3 + $0x90] sm:$0xff]
    %v170 = vld [vmem:[#allocation3 + $0x98] sm:$0xff]
    %v171 = vld [vmem:[#allocation3 + $0xa0] sm:$0xff]
    %v172 = vld [vmem:[#allocation3 + $0xa8] sm:$0xff]
    %v173 = vld [vmem:[#allocation3 + $0xb0] sm:$0xff]
    %v174 = vld [vmem:[#allocation3 + $0xb8] sm:$0xff]
    %v175 = vld [vmem:[#allocation3 + $0xc0] sm:$0xff]
    %v176 = vld [vmem:[#allocation3 + $0xc8] sm:$0xff]
    %v177 = vld [vmem:[#allocation3 + $0xd0] sm:$0xff]
    %v178 = vld [vmem:[#allocation3 + $0xd8] sm:$0xff]
    %v179 = vld [vmem:[#allocation3 + $0xe0] sm:$0xff]
    %v180 = vld [vmem:[#allocation3 + $0xe8] sm:$0xff]
    %v181 = vld [vmem:[#allocation3 + $0xf0] sm:$0xff]
    %v182 = vld [vmem:[#allocation3 + $0xf8] sm:$0xff]
    %v183 = vld [vmem:[%s6] sm:$0x3]
    %v185 = vperm.slane %v183, 0
    %v186 = vperm.slane %v183, 1
    %v221 = vunpack.c.l.b16 %v151
    %v222 = vunpack.c.h.b16 %v151
    %v223 = vunpack.c.l.b16 %v152
    %v224 = vunpack.c.h.b16 %v152
    %v225 = vunpack.c.l.b16 %v153
    %v226 = vunpack.c.h.b16 %v153
    %v227 = vunpack.c.l.b16 %v154
    %v228 = vunpack.c.h.b16 %v154
    %v229 = vunpack.c.l.b16 %v155
    %v230 = vunpack.c.h.b16 %v155
    %v231 = vunpack.c.l.b16 %v156
    %v232 = vunpack.c.h.b16 %v156
    %v233 = vunpack.c.l.b16 %v157
    %v234 = vunpack.c.h.b16 %v157
    %v235 = vunpack.c.l.b16 %v158
    %v236 = vunpack.c.h.b16 %v158
    %v237 = vunpack.c.l.b16 %v159
    %v238 = vunpack.c.h.b16 %v159
    %v239 = vunpack.c.l.b16 %v160
    %v240 = vunpack.c.h.b16 %v160
    %v241 = vunpack.c.l.b16 %v161
    %v242 = vunpack.c.h.b16 %v161
    %v243 = vunpack.c.l.b16 %v162
    %v244 = vunpack.c.h.b16 %v162
    %v245 = vunpack.c.l.b16 %v163
    %v246 = vunpack.c.h.b16 %v163
    %v247 = vunpack.c.l.b16 %v164
    %v248 = vunpack.c.h.b16 %v164
    %v249 = vunpack.c.l.b16 %v165
    %v250 = vunpack.c.h.b16 %v165
    %v251 = vunpack.c.l.b16 %v166
    %v252 = vunpack.c.h.b16 %v166
    %v253 = vunpack.c.l.b16 %v167
    %v254 = vunpack.c.h.b16 %v167
    %v255 = vunpack.c.l.b16 %v168
    %v256 = vunpack.c.h.b16 %v168
    %v257 = vunpack.c.l.b16 %v169
    %v258 = vunpack.c.h.b16 %v169
    %v259 = vunpack.c.l.b16 %v170
    %v260 = vunpack.c.h.b16 %v170
    %v261 = vunpack.c.l.b16 %v171
    %v262 = vunpack.c.h.b16 %v171
    %v263 = vunpack.c.l.b16 %v172
    %v264 = vunpack.c.h.b16 %v172
    %v265 = vunpack.c.l.b16 %v173
    %v266 = vunpack.c.h.b16 %v173
    %v267 = vunpack.c.l.b16 %v174
    %v268 = vunpack.c.h.b16 %v174
    %v269 = vunpack.c.l.b16 %v175
    %v270 = vunpack.c.h.b16 %v175
    %v271 = vunpack.c.l.b16 %v176
    %v272 = vunpack.c.h.b16 %v176
    %v273 = vunpack.c.l.b16 %v177
    %v274 = vunpack.c.h.b16 %v177
    %v275 = vunpack.c.l.b16 %v178
    %v276 = vunpack.c.h.b16 %v178
    %v277 = vunpack.c.l.b16 %v179
    %v278 = vunpack.c.h.b16 %v179
    %v279 = vunpack.c.l.b16 %v180
    %v280 = vunpack.c.h.b16 %v180
    %v281 = vunpack.c.l.b16 %v181
    %v282 = vunpack.c.h.b16 %v181
    %v283 = vunpack.c.l.b16 %v182
    %v284 = vunpack.c.h.b16 %v182
    %v285 = vpack.c.b16 %v223, %v221
    %v286 = vpack.c.b16 %v224, %v222
    %v287 = vpack.c.b16 %v227, %v225
    %v288 = vpack.c.b16 %v228, %v226
    %v289 = vpack.c.b16 %v231, %v229
    %v290 = vpack.c.b16 %v232, %v230
    %v291 = vpack.c.b16 %v235, %v233
    %v292 = vpack.c.b16 %v236, %v234
    %v293 = vpack.c.b16 %v239, %v237
    %v294 = vpack.c.b16 %v240, %v238
    %v295 = vpack.c.b16 %v243, %v241
    %v296 = vpack.c.b16 %v244, %v242
    %v297 = vpack.c.b16 %v247, %v245
    %v298 = vpack.c.b16 %v248, %v246
    %v299 = vpack.c.b16 %v251, %v249
    %v300 = vpack.c.b16 %v252, %v250
    %v301 = vpack.c.b16 %v255, %v253
    %v302 = vpack.c.b16 %v256, %v254
    %v303 = vpack.c.b16 %v259, %v257
    %v304 = vpack.c.b16 %v260, %v258
    %v305 = vpack.c.b16 %v263, %v261
    %v306 = vpack.c.b16 %v264, %v262
    %v307 = vpack.c.b16 %v267, %v265
    %v308 = vpack.c.b16 %v268, %v266
    %v309 = vpack.c.b16 %v271, %v269
    %v310 = vpack.c.b16 %v272, %v270
    %v311 = vpack.c.b16 %v275, %v273
    %v312 = vpack.c.b16 %v276, %v274
    %v313 = vpack.c.b16 %v279, %v277
    %v314 = vpack.c.b16 %v280, %v278
    %v315 = vpack.c.b16 %v283, %v281
    %v316 = vpack.c.b16 %v284, %v282
    %349 = vmatpush.bf16.msra.mxu0 %v299
    %350 = vmatpush.bf16.msra.mxu0 %v297
    %351 = vmatpush.bf16.msra.mxu0 %v295
    %352 = vmatpush.bf16.msra.mxu0 %v293
    %353 = vmatpush.bf16.msra.mxu0 %v291
    %354 = vmatpush.bf16.msra.mxu0 %v289
    %355 = vmatpush.bf16.msra.mxu0 %v287
    %356 = vmatpush.bf16.msra.mxu0 %v285
    %357 = vmatmul.bf16.gmra.mxu0 %v149
    %v358 = vpop.f32.mrf.mxu0
    %v359 = vadd.f32 %v185, %v358
    %v360 = vpop.f32.mrf.mxu0
    %361 = vdwg.mxu0
    %362 = vmatpush.bf16.msra.mxu0 %v315
    %363 = vmatpush.bf16.msra.mxu0 %v313
    %364 = vmatpush.bf16.msra.mxu0 %v311
    %365 = vmatpush.bf16.msra.mxu0 %v309
    %366 = vmatpush.bf16.msra.mxu0 %v307
    %367 = vmatpush.bf16.msra.mxu0 %v305
    %368 = vmatpush.bf16.msra.mxu0 %v303
    %369 = vmatpush.bf16.msra.mxu0 %v301
    %370 = vmatmul.bf16.gmra.mxu0 %v150
    %v371 = vpop.f32.mrf.mxu0
    %v372 = vadd.f32 %v359, %v371
    %v373 = vpop.f32.mrf.mxu0
    %374 = vdwg.mxu0
    %375 = vmatpush.bf16.msra.mxu0 %v300
    %376 = vmatpush.bf16.msra.mxu0 %v298
    %377 = vmatpush.bf16.msra.mxu0 %v296
    %378 = vmatpush.bf16.msra.mxu0 %v294
    %379 = vmatpush.bf16.msra.mxu0 %v292
    %380 = vmatpush.bf16.msra.mxu0 %v290
    %381 = vmatpush.bf16.msra.mxu0 %v288
    %382 = vmatpush.bf16.msra.mxu0 %v286
    %383 = vmatmul.bf16.gmra.mxu0 %v149
    %v384 = vpop.f32.mrf.mxu0
    %v385 = vadd.f32 %v186, %v384
    %v386 = vpop.f32.mrf.mxu0
    %387 = vdwg.mxu0
    %388 = vmatpush.bf16.msra.mxu0 %v316
    %389 = vmatpush.bf16.msra.mxu0 %v314
    %390 = vmatpush.bf16.msra.mxu0 %v312
    %391 = vmatpush.bf16.msra.mxu0 %v310
    %392 = vmatpush.bf16.msra.mxu0 %v308
    %393 = vmatpush.bf16.msra.mxu0 %v306
    %394 = vmatpush.bf16.msra.mxu0 %v304
    %395 = vmatpush.bf16.msra.mxu0 %v302
    %396 = vmatmul.bf16.gmra.mxu0 %v150
    %v397 = vpop.f32.mrf.mxu0
    %v398 = vadd.f32 %v385, %v397
    %v399 = vpop.f32.mrf.mxu0
    %400 = vdwg.mxu0
    %v401 = vmax.f32 %v372, 0.0
    %v402 = vmax.f32 %v398, 0.0
    %v403 = vpack.c.bf16 %v401, %v401
    %v404 = vpack.c.bf16 %v402, %v402
    %v405 = vld [vmem:[%s7] sm:$0xf]
    %v406 = vld [vmem:[%s7 + $0x4] sm:$0xf]
    %v407 = vld [vmem:[%s7 + $0x8] sm:$0xf]
    %v408 = vld [vmem:[%s7 + $0xc] sm:$0xf]
    %v409 = vld [vmem:[%s7 + $0x10] sm:$0xf]
    %v410 = vld [vmem:[%s7 + $0x14] sm:$0xf]
    %v411 = vld [vmem:[%s7 + $0x18] sm:$0xf]
    %v412 = vld [vmem:[%s7 + $0x1c] sm:$0xf]
    %v413 = vld [vmem:[%s7 + $0x20] sm:$0xf]
    %v414 = vld [vmem:[%s7 + $0x24] sm:$0xf]
    %v415 = vld [vmem:[%s7 + $0x28] sm:$0xf]
    %v416 = vld [vmem:[%s7 + $0x2c] sm:$0xf]
    %v417 = vld [vmem:[%s7 + $0x30] sm:$0xf]
    %v418 = vld [vmem:[%s7 + $0x34] sm:$0xf]
    %v419 = vld [vmem:[%s7 + $0x38] sm:$0xf]
    %v420 = vld [vmem:[%s7 + $0x3c] sm:$0xf]
    %v421 = vld [vmem:[%s7 + $0x40] sm:$0xf]
    %v422 = vld [vmem:[%s7 + $0x44] sm:$0xf]
    %v423 = vld [vmem:[%s7 + $0x48] sm:$0xf]
    %v424 = vld [vmem:[%s7 + $0x4c] sm:$0xf]
    %v425 = vld [vmem:[%s7 + $0x50] sm:$0xf]
    %v426 = vld [vmem:[%s7 + $0x54] sm:$0xf]
    %v427 = vld [vmem:[%s7 + $0x58] sm:$0xf]
    %v428 = vld [vmem:[%s7 + $0x5c] sm:$0xf]
    %v429 = vld [vmem:[%s7 + $0x60] sm:$0xf]
    %v430 = vld [vmem:[%s7 + $0x64] sm:$0xf]
    %v431 = vld [vmem:[%s7 + $0x68] sm:$0xf]
    %v432 = vld [vmem:[%s7 + $0x6c] sm:$0xf]
    %v433 = vld [vmem:[%s7 + $0x70] sm:$0xf]
    %v434 = vld [vmem:[%s7 + $0x74] sm:$0xf]
    %v435 = vld [vmem:[%s7 + $0x78] sm:$0xf]
    %v436 = vld [vmem:[%s7 + $0x7c] sm:$0xf]
    %s437 = sld [smem:[#allocation2]]
    %v438 = vstv %s437
    %v471 = vunpack.c.l.b16 %v405
    %v472 = vunpack.c.l.b16 %v406
    %v473 = vunpack.c.l.b16 %v407
    %v474 = vunpack.c.l.b16 %v408
    %v475 = vunpack.c.l.b16 %v409
    %v476 = vunpack.c.l.b16 %v410
    %v477 = vunpack.c.l.b16 %v411
    %v478 = vunpack.c.l.b16 %v412
    %v479 = vunpack.c.l.b16 %v413
    %v480 = vunpack.c.l.b16 %v414
    %v481 = vunpack.c.l.b16 %v415
    %v482 = vunpack.c.l.b16 %v416
    %v483 = vunpack.c.l.b16 %v417
    %v484 = vunpack.c.l.b16 %v418
    %v485 = vunpack.c.l.b16 %v419
    %v486 = vunpack.c.l.b16 %v420
    %v487 = vunpack.c.l.b16 %v421
    %v488 = vunpack.c.l.b16 %v422
    %v489 = vunpack.c.l.b16 %v423
    %v490 = vunpack.c.l.b16 %v424
    %v491 = vunpack.c.l.b16 %v425
    %v492 = vunpack.c.l.b16 %v426
    %v493 = vunpack.c.l.b16 %v427
    %v494 = vunpack.c.l.b16 %v428
    %v495 = vunpack.c.l.b16 %v429
    %v496 = vunpack.c.l.b16 %v430
    %v497 = vunpack.c.l.b16 %v431
    %v498 = vunpack.c.l.b16 %v432
    %v499 = vunpack.c.l.b16 %v433
    %v500 = vunpack.c.l.b16 %v434
    %v501 = vunpack.c.l.b16 %v435
    %v502 = vunpack.c.l.b16 %v436
    %v503 = vpack.c.b16 %v472, %v471
    %v504 = vpack.c.b16 %v474, %v473
    %v505 = vpack.c.b16 %v476, %v475
    %v506 = vpack.c.b16 %v478, %v477
    %v507 = vpack.c.b16 %v480, %v479
    %v508 = vpack.c.b16 %v482, %v481
    %v509 = vpack.c.b16 %v484, %v483
    %v510 = vpack.c.b16 %v486, %v485
    %v511 = vpack.c.b16 %v488, %v487
    %v512 = vpack.c.b16 %v490, %v489
    %v513 = vpack.c.b16 %v492, %v491
    %v514 = vpack.c.b16 %v494, %v493
    %v515 = vpack.c.b16 %v496, %v495
    %v516 = vpack.c.b16 %v498, %v497
    %v517 = vpack.c.b16 %v500, %v499
    %v518 = vpack.c.b16 %v502, %v501
    %535 = vmatpush.bf16.msra.mxu0 %v510
    %536 = vmatpush.bf16.msra.mxu0 %v509
    %537 = vmatpush.bf16.msra.mxu0 %v508
    %538 = vmatpush.bf16.msra.mxu0 %v507
    %539 = vmatpush.bf16.msra.mxu0 %v506
    %540 = vmatpush.bf16.msra.mxu0 %v505
    %541 = vmatpush.bf16.msra.mxu0 %v504
    %542 = vmatpush.bf16.msra.mxu0 %v503
    %543 = vmatmul.bf16.gmra.mxu0 %v403
    %v544 = vpop.f32.mrf.mxu0
    %v545 = vadd.f32 %v438, %v544
    %v546 = vpop.f32.mrf.mxu0
    %547 = vdwg.mxu0
    %548 = vmatpush.bf16.msra.mxu0 %v518
    %549 = vmatpush.bf16.msra.mxu0 %v517
    %550 = vmatpush.bf16.msra.mxu0 %v516
    %551 = vmatpush.bf16.msra.mxu0 %v515
    %552 = vmatpush.bf16.msra.mxu0 %v514
    %553 = vmatpush.bf16.msra.mxu0 %v513
    %554 = vmatpush.bf16.msra.mxu0 %v512
    %555 = vmatpush.bf16.msra.mxu0 %v511
    %556 = vmatmul.bf16.gmra.mxu0 %v404
    %v557 = vpop.f32.mrf.mxu0
    %v558 = vadd.f32 %v545, %v557
    %v559 = vpop.f32.mrf.mxu0
    %560 = vdwg.mxu0
    %vm561 = vcmask 7168
    %562 = vst.msk [vmem:[%s9] sm:$0xff] %vm561, %v558
    // Predicated region
    $region42: #{tpu_custom_call.1} parent=1 // pred_check
      _
    $region43: #{tpu_custom_call.1} parent=1 // pred_check_branch
      %564 = sbr.rel (0) target = $region45
    $region44: #{tpu_custom_call.1} parent=1 // pred_region
      _
    $region45: #{tpu_custom_call.1} parent=1 // pred_fallthru
      _
    // Predicated region
    $region46: #{tpu_custom_call.1} parent=1 // pred_check
      _
    $region47: #{tpu_custom_call.1} parent=1 // pred_check_branch
      %566 = sbr.rel (0) target = $region49
    $region48: #{tpu_custom_call.1} parent=1 // pred_region
      _
    $region49: #{tpu_custom_call.1} parent=1 // pred_fallthru
      _
    %567 = vsyncpa [#allocation4], 1

</llo_original>
